<compile_context>
chip_gen: v7x
topology: tpu7x:2x2x1
jax: 0.10.0
libtpu: 0.0.40
codegen_flags: <defaults>
</compile_context>

<pallas_src>
import jax
import jax.numpy as jnp
from jax.experimental import pallas as pl
from jax.experimental.pallas import tpu as pltpu


# --------------------------------------------------------------------------- #
# Kernels
# --------------------------------------------------------------------------- #
def _film_mlp_kernel(cond_ref, w1t_ref, b1_ref, w2t_ref, b2_ref, r_ref, b_ref):
    """Condition MLP:  film = sigmoid(c @ W1^T + b1) @ W2^T + b2;  r, b = split."""
    cond = cond_ref[...].astype(jnp.float32)                           # (B, Cc)
    h = jnp.dot(cond, w1t_ref[...].astype(jnp.float32),
                preferred_element_type=jnp.float32) + b1_ref[...]      # (B, Cc)
    h = jax.nn.sigmoid(h)                                              # EUP
    film = jnp.dot(h, w2t_ref[...].astype(jnp.float32),
                   preferred_element_type=jnp.float32) + b2_ref[...]   # (B, 2F)
    feat_len = r_ref.shape[1]
    # Cast to the feature dtype exactly once, here, so the streaming pass never
    # pays a per-step cast or relayout.
    r_ref[...] = film[:, :feat_len].astype(r_ref.dtype)
    b_ref[...] = film[:, feat_len:].astype(b_ref.dtype)


def _film_apply_kernel(r_ref, b_ref, feat_ref, o_ref):
    """Streaming excite: out = r * x + b with broadcast-ready r/b blocks."""
    # r_ref/b_ref: (block_b, block_f, 1), already in the feature dtype.
    o_ref[...] = r_ref[...] * feat_ref[...] + b_ref[...]


# --------------------------------------------------------------------------- #
# Tiling helpers
# --------------------------------------------------------------------------- #
def _default_vmem_limit_bytes():
    # ~3/4 of physical VMEM: ~48 MiB on v7x (64 MiB physical), ~96 MiB on
    # v5e/v6e (128 MiB physical).  Falls back to 48 MiB if the query fails.
    try:
        phys = pltpu.get_tpu_info().vmem_capacity_bytes
    except Exception:
        phys = 64 * 1024 * 1024
    return int(min(96 * 1024 * 1024, max(32 * 1024 * 1024, (phys * 3) // 4)))


def _largest_fitting_multiple(total, unit, fits):
    """Largest d = unit*m with d | total and fits(d); falls back to `unit`."""
    units = total // unit
    for m in range(units, 0, -1):
        if units % m == 0 and fits(unit * m):
            return unit * m
    return unit


def _choose_feature_blocks(B, F, T, itemsize, budget_bytes, f_unit):
    def nbytes(bb, bf, bt):
        return bb * bf * bt * itemsize

    # 1) Largest batch block whose full-(F, T) slab fits the per-block budget.
    bb, bf, bt = 1, F, T
    for d in range(B, 0, -1):
        if B % d == 0 and nbytes(d, F, T) <= budget_bytes:
            bb = d
            break

    # 2) If even (1, F, T) is too big, tile F first: every DMA segment stays a
    #    full contiguous row of length T and stores stay maximally lane-dense.
    if nbytes(bb, bf, bt) > budget_bytes and F % f_unit == 0 and F > f_unit:
        bf = _largest_fitting_multiple(
            F, f_unit, lambda d: nbytes(1, d, T) <= budget_bytes)

    # 3) Last resort: tile T in lane-dense multiples of 128.  If T is not a
    #    multiple of 128 we keep it whole and rely on vmem headroom.
    #    TODO(synk): pad T to a 128-multiple in the wrapper for that edge case.
    if nbytes(bb, bf, bt) > budget_bytes and T % 128 == 0 and T > 128:
        bt = _largest_fitting_multiple(
            T, 128, lambda d: nbytes(1, bf, d) <= budget_bytes)

    # 4) Megacore: if everything landed in one grid step but the slab is big
    #    enough to amortize the ~0.35us per-step overhead, split it so both
    #    v7x TensorCores get work (harmless on single-TC v5e/v6e).
    if (B // bb) * (F // bf) * (T // bt) == 1 and nbytes(bb, bf, bt) > (2 << 20):
        if bb % 2 == 0:
            bb //= 2
        elif bf % (2 * f_unit) == 0 and F % (bf // 2) == 0:
            bf //= 2
        elif bt % 256 == 0:
            bt //= 2

    return bb, bf, bt


# --------------------------------------------------------------------------- #
# Wrapper
# --------------------------------------------------------------------------- #
def film_pallas(feature, condition, w1, b1, w2, b2, *,
                block_b=None, block_f=None, block_t=None,
                vmem_limit_bytes=None):
    """feature: (B, feat_len, T); condition: (B, cond_len).
    Weights use the PyTorch nn.Linear layout:
      w1 (cond_len, cond_len), b1 (cond_len,),
      w2 (2*feat_len, cond_len), b2 (2*feat_len,)."""
    B, F, T = feature.shape
    Bc, Cc = condition.shape
    assert Bc == B
    assert w1.shape == (Cc, Cc) and b1.shape == (Cc,)
    assert w2.shape == (2 * F, Cc) and b2.shape == (2 * F,)

    if vmem_limit_bytes is None:
        vmem_limit_bytes = _default_vmem_limit_bytes()

    # ---- Stage 1: tiny condition MLP -> (r, b), cast once to feature dtype --
    w1t = jnp.transpose(w1)                      # (Cc, Cc)
    w2t = jnp.transpose(w2)                      # (Cc, 2F)  fused r|b layer
    b1r = b1.reshape(1, Cc).astype(jnp.float32)
    b2r = b2.reshape(1, 2 * F).astype(jnp.float32)

    r, b = pl.pallas_call(
        _film_mlp_kernel,
        out_shape=(jax.ShapeDtypeStruct((B, F), feature.dtype),
                   jax.ShapeDtypeStruct((B, F), feature.dtype)),
        grid_spec=pltpu.PrefetchScalarGridSpec(
            num_scalar_prefetch=0,
            grid=(1,),
            in_specs=[
                pl.BlockSpec((B, Cc), lambda i: (0, 0)),
                pl.BlockSpec((Cc, Cc), lambda i: (0, 0)),
                pl.BlockSpec((1, Cc), lambda i: (0, 0)),
                pl.BlockSpec((Cc, 2 * F), lambda i: (0, 0)),
                pl.BlockSpec((1, 2 * F), lambda i: (0, 0)),
            ],
            out_specs=(pl.BlockSpec((B, F), lambda i: (0, 0)),
                       pl.BlockSpec((B, F), lambda i: (0, 0))),
        ),
        compiler_params=pltpu.CompilerParams(
            dimension_semantics=("arbitrary",),
            vmem_limit_bytes=vmem_limit_bytes,
        ),
    )(condition, w1t, b1r, w2t, b2r)

    # Free reshapes (trailing unit dim): r/b become broadcast-ready (B, F, 1)
    # with F on sublanes, so the streaming kernel needs no relayout at all.
    r3 = r.reshape(B, F, 1)
    b3 = b.reshape(B, F, 1)

    # ---- Stage 2: streaming excite  out = r * x + b -------------------------
    itemsize = feature.dtype.itemsize
    f_unit = max(8, 32 // itemsize)          # sublane tile: 8 (f32), 16 (bf16)
    budget = max((vmem_limit_bytes - (2 << 20)) // 4, 1 << 20)
    bb, bf, bt = _choose_feature_blocks(B, F, T, itemsize, budget, f_unit)
    if block_b is not None:
        bb = block_b
    if block_f is not None:
        bf = block_f
    if block_t is not None:
        bt = block_t
    assert B % bb == 0 and F % bf == 0 and T % bt == 0
    assert bf % 8 == 0 or bf == F
    assert bt % 128 == 0 or bt == T

    grid = (B // bb, F // bf, T // bt)

    out = pl.pallas_call(
        _film_apply_kernel,
        out_shape=jax.ShapeDtypeStruct((B, F, T), feature.dtype),
        grid_spec=pltpu.PrefetchScalarGridSpec(
            num_scalar_prefetch=0,
            grid=grid,
            in_specs=[
                pl.BlockSpec((bb, bf, 1), lambda bi, fi, ti: (bi, fi, 0)),
                pl.BlockSpec((bb, bf, 1), lambda bi, fi, ti: (bi, fi, 0)),
                pl.BlockSpec((bb, bf, bt), lambda bi, fi, ti: (bi, fi, ti)),
            ],
            out_specs=pl.BlockSpec((bb, bf, bt), lambda bi, fi, ti: (bi, fi, ti)),
        ),
        compiler_params=pltpu.CompilerParams(
            # No cross-step carry -> every axis is parallel; on v7x this lets
            # megacore split the work across both TensorCores even when B == 1.
            dimension_semantics=("parallel", "parallel", "parallel"),
            vmem_limit_bytes=vmem_limit_bytes,
        ),
    )(r3, b3, feature)

    return out


def film_reference(feature, condition, w1, b1, w2, b2):
    """Pure-JAX reference matching the PyTorch FiLM forward."""
    feat_len = feature.shape[1]
    h = jax.nn.sigmoid(
        jnp.dot(condition, w1.T, precision=jax.lax.Precision.HIGHEST) + b1)
    film = jnp.dot(h, w2.T, precision=jax.lax.Precision.HIGHEST) + b2
    r = film[:, :feat_len][:, :, None]
    b = film[:, feat_len:][:, :, None]
    return r * feature + b


if __name__ == "__main__":
    # Small shapes consistent with the module: FiLM(condition_len=64, feature_len=32)
    # applied to a (B, feature_len, T) feature map.
    B, condition_len, feature_len, T = 2, 64, 32, 128

    key = jax.random.PRNGKey(0)
    kf, kc, kw1, kb1, kw2, kb2 = jax.random.split(key, 6)
    feature = jax.random.normal(kf, (B, feature_len, T), dtype=jnp.float32)
    condition = jax.random.normal(kc, (B, condition_len), dtype=jnp.float32)
    # PyTorch nn.Linear weight layout: (out_features, in_features).
    w1 = jax.random.normal(kw1, (condition_len, condition_len), dtype=jnp.float32) * 0.05
    b1 = jax.random.normal(kb1, (condition_len,), dtype=jnp.float32) * 0.05
    w2 = jax.random.normal(kw2, (2 * feature_len, condition_len), dtype=jnp.float32) * 0.05
    b2 = jax.random.normal(kb2, (2 * feature_len,), dtype=jnp.float32) * 0.05

    # f32 path.
    out = jax.block_until_ready(film_pallas(feature, condition, w1, b1, w2, b2))
    ref = film_reference(feature, condition, w1, b1, w2, b2)
    assert out.shape == feature.shape
    assert jnp.allclose(out, ref, atol=1e-4, rtol=1e-4), "f32 mismatch vs reference"

    # bf16 feature path (r/b are cast to the feature dtype once in the MLP
    # kernel; the streaming fma runs in bf16) -> loose tolerance.
    feature_bf = feature.astype(jnp.bfloat16)
    out_bf = jax.block_until_ready(film_pallas(feature_bf, condition, w1, b1, w2, b2))
    ref_bf = film_reference(feature_bf.astype(jnp.float32), condition, w1, b1, w2, b2)
    assert out_bf.dtype == jnp.bfloat16
    assert jnp.allclose(out_bf.astype(jnp.float32), ref_bf, atol=1e-1, rtol=1e-1), \
        "bf16 mismatch vs reference"

    print("KERNEL_OK")
</pallas_src>

<mosaic_0001>
module attributes {stable_mosaic.version = 11 : i64} {
  func.func @_film_mlp_kernel(%arg0: i32, %arg1: memref<2x64xf32, #tpu.memory_space<vmem>>, %arg2: memref<64x64xf32, #tpu.memory_space<vmem>>, %arg3: memref<1x64xf32, #tpu.memory_space<vmem>>, %arg4: memref<64x64xf32, #tpu.memory_space<vmem>>, %arg5: memref<1x64xf32, #tpu.memory_space<vmem>>, %arg6: memref<2x32xf32, #tpu.memory_space<vmem>>, %arg7: memref<2x32xf32, #tpu.memory_space<vmem>>) attributes {dimension_semantics = [#tpu.dimension_semantics<arbitrary>], iteration_bounds = array<i64: 1>, scalar_prefetch = 0 : i64, scratch_operands = 0 : i64, tpu.core_type = #tpu.core_type<tc>, window_params = [{pipeline_mode = #tpu.pipeline_mode<synchronous>, transform_indices = @transform_0, window_bounds = array<i64: 2, 64>}, {pipeline_mode = #tpu.pipeline_mode<synchronous>, transform_indices = @transform_1, window_bounds = array<i64: 64, 64>}, {pipeline_mode = #tpu.pipeline_mode<synchronous>, transform_indices = @transform_2, window_bounds = array<i64: 1, 64>}, {pipeline_mode = #tpu.pipeline_mode<synchronous>, transform_indices = @transform_3, window_bounds = array<i64: 64, 64>}, {pipeline_mode = #tpu.pipeline_mode<synchronous>, transform_indices = @transform_4, window_bounds = array<i64: 1, 64>}, {pipeline_mode = #tpu.pipeline_mode<synchronous>, transform_indices = @transform_5, window_bounds = array<i64: 2, 32>}, {pipeline_mode = #tpu.pipeline_mode<synchronous>, transform_indices = @transform_6, window_bounds = array<i64: 2, 32>}]} {
    %c0 = arith.constant 0 : index
    %c0_0 = arith.constant 0 : index
    %0 = vector.load %arg1[%c0, %c0_0] : memref<2x64xf32, #tpu.memory_space<vmem>>, vector<2x64xf32>
    %c0_1 = arith.constant 0 : index
    %c0_2 = arith.constant 0 : index
    %1 = vector.load %arg2[%c0_1, %c0_2] : memref<64x64xf32, #tpu.memory_space<vmem>>, vector<64x64xf32>
    %cst = arith.constant dense<0.000000e+00> : vector<2x64xf32>
    %2 = tpu.matmul %0, %1, %cst {dimension_numbers = #tpu.dot_dimension_numbers<[1], [0], [0], [1], [0, 0, 1, 1], [], []>} : vector<2x64xf32>, vector<64x64xf32>, vector<2x64xf32> -> vector<2x64xf32>
    %c0_3 = arith.constant 0 : index
    %c0_4 = arith.constant 0 : index
    %3 = vector.load %arg3[%c0_3, %c0_4] : memref<1x64xf32, #tpu.memory_space<vmem>>, vector<1x64xf32>
    %4 = vector.broadcast %3 : vector<1x64xf32> to vector<2x64xf32>
    %5 = arith.addf %2, %4 : vector<2x64xf32>
    %6 = arith.negf %5 : vector<2x64xf32>
    %7 = math.exp %6 : vector<2x64xf32>
    %cst_5 = arith.constant 1.000000e+00 : f32
    %8 = vector.broadcast %cst_5 : f32 to vector<2x64xf32>
    %9 = arith.addf %8, %7 : vector<2x64xf32>
    %10 = arith.divf %8, %9 : vector<2x64xf32>
    %c0_6 = arith.constant 0 : index
    %c0_7 = arith.constant 0 : index
    %11 = vector.load %arg4[%c0_6, %c0_7] : memref<64x64xf32, #tpu.memory_space<vmem>>, vector<64x64xf32>
    %cst_8 = arith.constant dense<0.000000e+00> : vector<2x64xf32>
    %12 = tpu.matmul %10, %11, %cst_8 {dimension_numbers = #tpu.dot_dimension_numbers<[1], [0], [0], [1], [0, 0, 1, 1], [], []>} : vector<2x64xf32>, vector<64x64xf32>, vector<2x64xf32> -> vector<2x64xf32>
    %c0_9 = arith.constant 0 : index
    %c0_10 = arith.constant 0 : index
    %13 = vector.load %arg5[%c0_9, %c0_10] : memref<1x64xf32, #tpu.memory_space<vmem>>, vector<1x64xf32>
    %14 = vector.broadcast %13 : vector<1x64xf32> to vector<2x64xf32>
    %15 = arith.addf %12, %14 : vector<2x64xf32>
    %16 = vector.extract_strided_slice %15 {offsets = [0, 0], sizes = [2, 32], strides = [1, 1]} : vector<2x64xf32> to vector<2x32xf32>
    %c0_11 = arith.constant 0 : index
    %c0_12 = arith.constant 0 : index
    %17 = vector.load %arg6[%c0_11, %c0_12] : memref<2x32xf32, #tpu.memory_space<vmem>>, vector<2x32xf32>
    tpu.vector_store %arg6[%c0_11, %c0_12], %16 {strides = array<i32>} : memref<2x32xf32, #tpu.memory_space<vmem>>, vector<2x32xf32>,
    %18 = vector.extract_strided_slice %15 {offsets = [0, 32], sizes = [2, 32], strides = [1, 1]} : vector<2x64xf32> to vector<2x32xf32>
    %c0_13 = arith.constant 0 : index
    %c0_14 = arith.constant 0 : index
    %19 = vector.load %arg7[%c0_13, %c0_14] : memref<2x32xf32, #tpu.memory_space<vmem>>, vector<2x32xf32>
    tpu.vector_store %arg7[%c0_13, %c0_14], %18 {strides = array<i32>} : memref<2x32xf32, #tpu.memory_space<vmem>>, vector<2x32xf32>,
    return
  }
  func.func @transform_0(%arg0: i32) -> (i32, i32) {
    %c0_i32 = arith.constant 0 : i32
    %c0_i32_0 = arith.constant 0 : i32
    %c0_i32_1 = arith.constant 0 : i32
    return %c0_i32, %c0_i32_0 : i32, i32
  }
  func.func @transform_1(%arg0: i32) -> (i32, i32) {
    %c0_i32 = arith.constant 0 : i32
    %c0_i32_0 = arith.constant 0 : i32
    %c0_i32_1 = arith.constant 0 : i32
    return %c0_i32, %c0_i32_0 : i32, i32
  }
  func.func @transform_2(%arg0: i32) -> (i32, i32) {
    %c0_i32 = arith.constant 0 : i32
    %c0_i32_0 = arith.constant 0 : i32
    %c0_i32_1 = arith.constant 0 : i32
    return %c0_i32, %c0_i32_0 : i32, i32
  }
  func.func @transform_3(%arg0: i32) -> (i32, i32) {
    %c0_i32 = arith.constant 0 : i32
    %c0_i32_0 = arith.constant 0 : i32
    %c0_i32_1 = arith.constant 0 : i32
    return %c0_i32, %c0_i32_0 : i32, i32
  }
  func.func @transform_4(%arg0: i32) -> (i32, i32) {
    %c0_i32 = arith.constant 0 : i32
    %c0_i32_0 = arith.constant 0 : i32
    %c0_i32_1 = arith.constant 0 : i32
    return %c0_i32, %c0_i32_0 : i32, i32
  }
  func.func @transform_5(%arg0: i32) -> (i32, i32) {
    %c0_i32 = arith.constant 0 : i32
    %c0_i32_0 = arith.constant 0 : i32
    %c0_i32_1 = arith.constant 0 : i32
    return %c0_i32, %c0_i32_0 : i32, i32
  }
  func.func @transform_6(%arg0: i32) -> (i32, i32) {
    %c0_i32 = arith.constant 0 : i32
    %c0_i32_0 = arith.constant 0 : i32
    %c0_i32_1 = arith.constant 0 : i32
    return %c0_i32, %c0_i32_0 : i32, i32
  }
}

</mosaic_0001>

<llo_original>
// kernel: tpu_custom_call.1
$region0: #{tpu_custom_call.1}
  #allocation0 [shape = 'u32[]', space=smem, size = 0x4, offset = 0x4, fixed_abs, tag = 'smem constant byte address 0x4 - core index']
  #allocation1 [shape = 'u32[144,128]{1,0:T(1,128)}', space=vmem, size = 0x12000, scoped, tag = 'internal scratch']
  %s0 = inlined_call_operand.hbm [shape: f32[2,64], index: 0, kind: input, shape index: {}]
  %s1 = inlined_call_operand.hbm [shape: f32[64,64], index: 1, kind: input, shape index: {}]
  %s2 = inlined_call_operand.vmem [shape: f32[1,64], index: 2, kind: input, shape index: {}]
  %s3 = inlined_call_operand.hbm [shape: f32[64,64], index: 3, kind: input, shape index: {}]
  %s4 = inlined_call_operand.vmem [shape: f32[1,64], index: 4, kind: input, shape index: {}]
  %s5 = inlined_call_operand.hbm [shape: f32[2,32], index: 5, kind: output, shape index: {0}]
  %s6 = inlined_call_operand.hbm [shape: f32[2,32], index: 6, kind: output, shape index: {1}]
  %7 = xla_tuple %s5, %s6
  %s8 = sld [smem:[#allocation0]]
  $region50: #{tpu_custom_call.1} parent=0
    _
  %s10 = ssub.s32 1, %s8
  %s11 = scalar_select 0, %s10, %s8
  $region1: #{tpu_custom_call.1} parent=0
    #allocation2 [shape = 'u8[1024]{0}', space=vmem, size = 0x400, scoped, tag = 'input window, operand 0, single buffered']
    #allocation3 [shape = 's32[1]{0}', space=sflag, size = 0x4, scoped, tag = 'scoped memory for tpu_custom_call.1']
    #allocation4 [shape = 's32[1]{0}', space=sflag, size = 0x4, scoped, tag = 'scoped memory for tpu_custom_call.1']
    #allocation5 [shape = 'u8[32768]{0}', space=vmem, size = 0x8000, scoped, tag = 'input window, operand 1, single buffered']
    #allocation6 [shape = 's32[1]{0}', space=sflag, size = 0x4, scoped, tag = 'scoped memory for tpu_custom_call.1']
    #allocation7 [shape = 'u8[32768]{0}', space=vmem, size = 0x8000, scoped, tag = 'input window, operand 3, single buffered']
    #allocation8 [shape = 'u8[1024]{0}', space=vmem, size = 0x400, scoped, tag = 'output window, operand 0, single buffered']
    #allocation9 [shape = 'u8[1024]{0}', space=vmem, size = 0x400, scoped, tag = 'output window, operand 1, single buffered']
    #allocation10 [shape = 's32[1]{0}', space=sflag, size = 0x4, scoped, tag = 'scoped memory for tpu_custom_call.1']
    %12 = vsyncpa [#allocation3], 0
    %13 = vsyncpa [#allocation6], 0
    %14 = vsyncpa [#allocation4], 0
    %15 = vsyncpa [#allocation10], 0
    // Predicated region
    $region2: #{tpu_custom_call.1} parent=1 // pred_check
      _
    $region3: #{tpu_custom_call.1} parent=1 // pred_check_branch
      %17 = sbr.rel (0) target = $region5
    $region4: #{tpu_custom_call.1} parent=1 // pred_region
      %s19 = ssub.s32 32, 32
      %20 = vsyncadd [#allocation3], %s19
      %s22 = sshll.u32 [#allocation2], 4
      %s23 = int_to_ptr.vmem [resolvable:$true] %s22
      %25 = dma.hbm_to_vmem [thread:$0]  %s0, 32, %s23, [#allocation3]
    $region5: #{tpu_custom_call.1} parent=1 // pred_fallthru
      _
    // Predicated region
    $region6: #{tpu_custom_call.1} parent=1 // pred_check
      _
    $region7: #{tpu_custom_call.1} parent=1 // pred_check_branch
      %27 = sbr.rel (0) target = $region9
    $region8: #{tpu_custom_call.1} parent=1 // pred_region
      %s29 = ssub.s32 1024, 1024
      %30 = vsyncadd [#allocation6], %s29
      %s31 = sshll.u32 [#allocation5], 4
      %s32 = int_to_ptr.vmem [resolvable:$true] %s31
      %37 = dma.hbm_to_vmem [thread:$0]  %s1, 1024, %s32, [#allocation6], 128, 128, 8
    $region9: #{tpu_custom_call.1} parent=1 // pred_fallthru
      _
    // Predicated region
    $region10: #{tpu_custom_call.1} parent=1 // pred_check
      _
    $region11: #{tpu_custom_call.1} parent=1 // pred_check_branch
      %39 = sbr.rel (0) target = $region13
    $region12: #{tpu_custom_call.1} parent=1 // pred_region
      _
    $region13: #{tpu_custom_call.1} parent=1 // pred_fallthru
      _
    // Predicated region
    $region14: #{tpu_custom_call.1} parent=1 // pred_check
      _
    $region15: #{tpu_custom_call.1} parent=1 // pred_check_branch
      %41 = sbr.rel (0) target = $region17
    $region16: #{tpu_custom_call.1} parent=1 // pred_region
      %s43 = ssub.s32 1024, 1024
      %44 = vsyncadd [#allocation6], %s43
      %s45 = sshll.u32 [#allocation7], 4
      %s46 = int_to_ptr.vmem [resolvable:$true] %s45
      %51 = dma.hbm_to_vmem [thread:$0]  %s3, 1024, %s46, [#allocation6], 128, 128, 8
    $region17: #{tpu_custom_call.1} parent=1 // pred_fallthru
      _
    // Predicated region
    $region18: #{tpu_custom_call.1} parent=1 // pred_check
      _
    $region19: #{tpu_custom_call.1} parent=1 // pred_check_branch
      %53 = sbr.rel (0) target = $region21
    $region20: #{tpu_custom_call.1} parent=1 // pred_region
      _
    $region21: #{tpu_custom_call.1} parent=1 // pred_fallthru
      _
    // Predicated region
    $region22: #{tpu_custom_call.1} parent=1 // pred_check
      _
    $region23: #{tpu_custom_call.1} parent=1 // pred_check_branch
      %55 = sbr.rel (0) target = $region25
    $region24: #{tpu_custom_call.1} parent=1 // pred_region
      %56 = dma.done [#allocation3], 32
    $region25: #{tpu_custom_call.1} parent=1 // pred_fallthru
      _
    // Predicated region
    $region26: #{tpu_custom_call.1} parent=1 // pred_check
      _
    $region27: #{tpu_custom_call.1} parent=1 // pred_check_branch
      %58 = sbr.rel (0) target = $region29
    $region28: #{tpu_custom_call.1} parent=1 // pred_region
      %59 = dma.done [#allocation6], 1024
    $region29: #{tpu_custom_call.1} parent=1 // pred_fallthru
      _
    // Predicated region
    $region30: #{tpu_custom_call.1} parent=1 // pred_check
      _
    $region31: #{tpu_custom_call.1} parent=1 // pred_check_branch
      %61 = sbr.rel (0) target = $region33
    $region32: #{tpu_custom_call.1} parent=1 // pred_region
      %62 = dma.done [#allocation6], 1024
    $region33: #{tpu_custom_call.1} parent=1 // pred_fallthru
      _
    %v63 = vld [vmem:[#allocation2] sm:$0x3]
    %v64 = vld [vmem:[#allocation5] sm:$0xff]
    %v65 = vld [vmem:[#allocation5 + $0x8] sm:$0xff]
    %v66 = vld [vmem:[#allocation5 + $0x10] sm:$0xff]
    %v67 = vld [vmem:[#allocation5 + $0x18] sm:$0xff]
    %v68 = vld [vmem:[#allocation5 + $0x20] sm:$0xff]
    %v69 = vld [vmem:[#allocation5 + $0x28] sm:$0xff]
    %v70 = vld [vmem:[#allocation5 + $0x30] sm:$0xff]
    %v71 = vld [vmem:[#allocation5 + $0x38] sm:$0xff]
    %v72 = vld [vmem:[%s2] sm:$0x1]
    %v74 = vlaneseq
    %v75 = vshrl.u32 %v74, 7
    %v76 = vsub.s32 0, %v75
    %v77 = vrot.slane %v72, %v76
    %vm79 = vcmask 523264
    %v81 = vsel %vm79, %v63, 0
    %83 = vmatprep.subr.mxu0 0.0
    %84 = vmatpush1.msra.mxu0 %v64
    %85 = vmatprep.subr.mxu0 0.0
    %86 = vmatpush1.msra.mxu0 %v65
    %87 = vmatprep.subr.mxu0 0.0
    %88 = vmatpush1.msra.mxu0 %v66
    %89 = vmatprep.subr.mxu0 0.0
    %90 = vmatpush1.msra.mxu0 %v67
    %91 = vmatprep.subr.mxu0 0.0
    %92 = vmatpush1.msra.mxu0 %v68
    %93 = vmatprep.subr.mxu0 0.0
    %94 = vmatpush1.msra.mxu0 %v69
    %95 = vmatprep.subr.mxu0 0.0
    %96 = vmatpush1.msra.mxu0 %v70
    %97 = vmatprep.subr.mxu0 0.0
    %98 = vmatpush1.msra.mxu0 %v71
    %99 = vmatprep.subr.mxu0 0.0
    %100 = vmatpush1.msra.mxu0 0.0
    %101 = vmatprep.subr.mxu0 0.0
    %102 = vmatpush1.msra.mxu0 0.0
    %103 = vmatprep.subr.mxu0 0.0
    %104 = vmatpush1.msra.mxu0 0.0
    %105 = vmatprep.subr.mxu0 0.0
    %106 = vmatpush1.msra.mxu0 0.0
    %107 = vmatprep.subr.mxu0 0.0
    %108 = vmatpush1.msra.mxu0 0.0
    %109 = vmatprep.subr.mxu0 0.0
    %110 = vmatpush1.msra.mxu0 0.0
    %111 = vmatprep.subr.mxu0 0.0
    %112 = vmatpush1.msra.mxu0 0.0
    %113 = vmatprep.subr.mxu0 0.0
    %114 = vmatpush1.msra.mxu0 0.0
    %115 = vmatprep.subr.mxu0 0.0
    %116 = vmatpush1.msra.mxu0 0.0
    %117 = vmatprep.subr.mxu0 0.0
    %118 = vmatpush1.msra.mxu0 0.0
    %119 = vmatprep.subr.mxu0 0.0
    %120 = vmatpush1.msra.mxu0 0.0
    %121 = vmatprep.subr.mxu0 0.0
    %122 = vmatpush1.msra.mxu0 0.0
    %123 = vmatprep.subr.mxu0 0.0
    %124 = vmatpush1.msra.mxu0 0.0
    %125 = vmatprep.subr.mxu0 0.0
    %126 = vmatpush1.msra.mxu0 0.0
    %127 = vmatprep.subr.mxu0 0.0
    %128 = vmatpush1.msra.mxu0 0.0
    %129 = vmatprep.subr.mxu0 0.0
    %130 = vmatpush1.msra.mxu0 0.0
    %131 = vmatprep.subr.mxu0 0.0
    %132 = vmatpush1.msra.mxu0 0.0
    %133 = vmatprep.subr.mxu0 0.0
    %134 = vmatpush1.msra.mxu0 0.0
    %135 = vmatprep.subr.mxu0 0.0
    %136 = vmatpush1.msra.mxu0 0.0
    %137 = vmatprep.subr.mxu0 0.0
    %138 = vmatpush1.msra.mxu0 0.0
    %139 = vmatprep.subr.mxu0 0.0
    %140 = vmatpush1.msra.mxu0 0.0
    %141 = vmatprep.subr.mxu0 0.0
    %142 = vmatpush1.msra.mxu0 0.0
    %143 = vmatprep.subr.mxu0 0.0
    %144 = vmatpush1.msra.mxu0 0.0
    %145 = vmatprep.subr.mxu0 0.0
    %146 = vmatpush1.msra.mxu0 0.0
    %147 = vmatprep.mubr.f32.mxu0 0.0
    %148 = vmatmul.mubr.f32.gmra.mrb[0].mxu0 %v81
    %v149 = vpop.f32.mrb[0].mxu0
    %v150 = vadd.f32 %v77, %v149
    %v151 = vpop.f32.mrb[0].mxu0
    %152 = vdwg.mxu0
    %v153 = vxor.u32 %v150, 2147483648
    %v154 = vmul.f32 %v153, 1.442695
    %v155 = vpow.pop %v154
    %v156 = vadd.f32 %v155, 1.0
    %v157 = vrcp.pop %v156
    %v158 = vmul.f32 1.0, %v157
    %v159 = vld [vmem:[#allocation7] sm:$0xff]
    %v160 = vld [vmem:[#allocation7 + $0x8] sm:$0xff]
    %v161 = vld [vmem:[#allocation7 + $0x10] sm:$0xff]
    %v162 = vld [vmem:[#allocation7 + $0x18] sm:$0xff]
    %v163 = vld [vmem:[#allocation7 + $0x20] sm:$0xff]
    %v164 = vld [vmem:[#allocation7 + $0x28] sm:$0xff]
    %v165 = vld [vmem:[#allocation7 + $0x30] sm:$0xff]
    %v166 = vld [vmem:[#allocation7 + $0x38] sm:$0xff]
    %v167 = vld [vmem:[%s4] sm:$0x1]
    %v169 = vlaneseq
    %v170 = vshrl.u32 %v169, 7
    %v171 = vsub.s32 0, %v170
    %v172 = vrot.slane %v167, %v171
    %v175 = vsel %vm79, %v158, 0
    %177 = vmatprep.subr.mxu0 0.0
    %178 = vmatpush1.msra.mxu0 %v159
    %179 = vmatprep.subr.mxu0 0.0
    %180 = vmatpush1.msra.mxu0 %v160
    %181 = vmatprep.subr.mxu0 0.0
    %182 = vmatpush1.msra.mxu0 %v161
    %183 = vmatprep.subr.mxu0 0.0
    %184 = vmatpush1.msra.mxu0 %v162
    %185 = vmatprep.subr.mxu0 0.0
    %186 = vmatpush1.msra.mxu0 %v163
    %187 = vmatprep.subr.mxu0 0.0
    %188 = vmatpush1.msra.mxu0 %v164
    %189 = vmatprep.subr.mxu0 0.0
    %190 = vmatpush1.msra.mxu0 %v165
    %191 = vmatprep.subr.mxu0 0.0
    %192 = vmatpush1.msra.mxu0 %v166
    %193 = vmatprep.subr.mxu0 0.0
    %194 = vmatpush1.msra.mxu0 0.0
    %195 = vmatprep.subr.mxu0 0.0
    %196 = vmatpush1.msra.mxu0 0.0
    %197 = vmatprep.subr.mxu0 0.0
    %198 = vmatpush1.msra.mxu0 0.0
    %199 = vmatprep.subr.mxu0 0.0
    %200 = vmatpush1.msra.mxu0 0.0
    %201 = vmatprep.subr.mxu0 0.0
    %202 = vmatpush1.msra.mxu0 0.0
    %203 = vmatprep.subr.mxu0 0.0
    %204 = vmatpush1.msra.mxu0 0.0
    %205 = vmatprep.subr.mxu0 0.0
    %206 = vmatpush1.msra.mxu0 0.0
    %207 = vmatprep.subr.mxu0 0.0
    %208 = vmatpush1.msra.mxu0 0.0
    %209 = vmatprep.subr.mxu0 0.0
    %210 = vmatpush1.msra.mxu0 0.0
    %211 = vmatprep.subr.mxu0 0.0
    %212 = vmatpush1.msra.mxu0 0.0
    %213 = vmatprep.subr.mxu0 0.0
    %214 = vmatpush1.msra.mxu0 0.0
    %215 = vmatprep.subr.mxu0 0.0
    %216 = vmatpush1.msra.mxu0 0.0
    %217 = vmatprep.subr.mxu0 0.0
    %218 = vmatpush1.msra.mxu0 0.0
    %219 = vmatprep.subr.mxu0 0.0
    %220 = vmatpush1.msra.mxu0 0.0
    %221 = vmatprep.subr.mxu0 0.0
    %222 = vmatpush1.msra.mxu0 0.0
    %223 = vmatprep.subr.mxu0 0.0
    %224 = vmatpush1.msra.mxu0 0.0
    %225 = vmatprep.subr.mxu0 0.0
    %226 = vmatpush1.msra.mxu0 0.0
    %227 = vmatprep.subr.mxu0 0.0
    %228 = vmatpush1.msra.mxu0 0.0
    %229 = vmatprep.subr.mxu0 0.0
    %230 = vmatpush1.msra.mxu0 0.0
    %231 = vmatprep.subr.mxu0 0.0
    %232 = vmatpush1.msra.mxu0 0.0
    %233 = vmatprep.subr.mxu0 0.0
    %234 = vmatpush1.msra.mxu0 0.0
    %235 = vmatprep.subr.mxu0 0.0
    %236 = vmatpush1.msra.mxu0 0.0
    %237 = vmatprep.subr.mxu0 0.0
    %238 = vmatpush1.msra.mxu0 0.0
    %239 = vmatprep.subr.mxu0 0.0
    %240 = vmatpush1.msra.mxu0 0.0
    %241 = vmatprep.mubr.f32.mxu0 0.0
    %242 = vmatmul.mubr.f32.gmra.mrb[0].mxu0 %v175
    %v243 = vpop.f32.mrb[0].mxu0
    %v244 = vadd.f32 %v172, %v243
    %v245 = vpop.f32.mrb[0].mxu0
    %246 = vdwg.mxu0
    %vm247 = vcmask 254976
    %248 = vst.msk [vmem:[#allocation8] sm:$0x3] %vm247, %v244
    %250 = vrot.lane.b32.xlu0 %v244, 96
    %v251 = vpop.permute.xlu0 %250
    %253 = vst.msk [vmem:[#allocation9] sm:$0x3] %vm247, %v251
    // Predicated region
    $region34: #{tpu_custom_call.1} parent=1 // pred_check
      _
    $region35: #{tpu_custom_call.1} parent=1 // pred_check_branch
      %255 = sbr.rel (0) target = $region37
    $region36: #{tpu_custom_call.1} parent=1 // pred_region
      %s257 = ssub.s32 32, 32
      %258 = vsyncadd [#allocation4], %s257
      %s260 = sshll.u32 [#allocation8], 4
      %s261 = int_to_ptr.vmem [resolvable:$true] %s260
      %263 = dma.vmem_to_hbm [thread:$0]  %s261, 32, %s5, [#allocation4]
    $region37: #{tpu_custom_call.1} parent=1 // pred_fallthru
      _
    // Predicated region
    $region38: #{tpu_custom_call.1} parent=1 // pred_check
      _
    $region39: #{tpu_custom_call.1} parent=1 // pred_check_branch
      %265 = sbr.rel (0) target = $region41
    $region40: #{tpu_custom_call.1} parent=1 // pred_region
      %s267 = ssub.s32 32, 32
      %268 = vsyncadd [#allocation10], %s267
      %s270 = sshll.u32 [#allocation9], 4
      %s271 = int_to_ptr.vmem [resolvable:$true] %s270
      %273 = dma.vmem_to_hbm [thread:$0]  %s271, 32, %s6, [#allocation10]
    $region41: #{tpu_custom_call.1} parent=1 // pred_fallthru
      _
    // Predicated region
    $region42: #{tpu_custom_call.1} parent=1 // pred_check
      _
    $region43: #{tpu_custom_call.1} parent=1 // pred_check_branch
      %275 = sbr.rel (0) target = $region45
    $region44: #{tpu_custom_call.1} parent=1 // pred_region
      %276 = dma.done [#allocation4], 32
    $region45: #{tpu_custom_call.1} parent=1 // pred_fallthru
      _
    // Predicated region
    $region46: #{tpu_custom_call.1} parent=1 // pred_check
      _
    $region47: #{tpu_custom_call.1} parent=1 // pred_check_branch
      %278 = sbr.rel (0) target = $region49
    $region48: #{tpu_custom_call.1} parent=1 // pred_region
      %279 = dma.done [#allocation10], 32
    $region49: #{tpu_custom_call.1} parent=1 // pred_fallthru
      _
    %280 = vsyncpa [#allocation3], 1
    %281 = vsyncpa [#allocation6], 1
    %282 = vsyncpa [#allocation4], 1
    %283 = vsyncpa [#allocation10], 1

</llo_original>
